<compile_context>
chip_gen: v6e
topology: v6e:2x2x1
jax: 0.10.0
libtpu: 0.0.40
codegen_flags: <defaults>
</compile_context>

<pallas_src>
import functools

import jax
import jax.numpy as jnp
from jax import lax
from jax.experimental import pallas as pl
from jax.experimental.pallas import tpu as pltpu

BN_EPS = 1e-5
LANE = 128
_SMEM_IDS_BUDGET = 128 * 1024        # max bytes of token ids scalar-prefetched to SMEM
_EMB_VMEM_BUDGET = 8 * 1024 * 1024   # max bytes of embedding table kept resident in VMEM


def _round_up(x, m):
    return (x + m - 1) // m * m


def _choose_batch_tiling(batch):
    """Batch tile / padded batch. Multiples of 128 rows; >=2 steps when there
    is enough work to split (v7x dual-TC); padding waste bounded ~128 rows/tile."""
    b128 = _round_up(batch, 128)
    if b128 <= 1024:
        return b128, b128                       # one step: splitting tiny work is pure overhead
    n_tiles = max(2, pl.cdiv(b128, 2048))       # tiles <= ~2048 rows, at least 2 steps
    tile_b = _round_up(pl.cdiv(b128, n_tiles), 128)
    return tile_b, tile_b * n_tiles


def _mlp(x_bf16, w1, b1, w2, b2, w3, b3):
    """fc1(+bn1)->relu, fc2(+bn2)->relu, fc2(+bn2)->relu (torch reuse), fc3."""
    h = jnp.dot(x_bf16, w1, preferred_element_type=jnp.float32) + b1
    h = jnp.maximum(h, 0.0).astype(jnp.bfloat16)
    h = jnp.dot(h, w2, preferred_element_type=jnp.float32) + b2
    h = jnp.maximum(h, 0.0).astype(jnp.bfloat16)
    h = jnp.dot(h, w2, preferred_element_type=jnp.float32) + b2
    h = jnp.maximum(h, 0.0).astype(jnp.bfloat16)
    return jnp.dot(h, w3, preferred_element_type=jnp.float32) + b3


def fused_bow_kernel(seq_len, ids_ref, emb_ref, w1_ref, b1_ref, w2_ref, b2_ref,
                     w3_ref, b3_ref, out_ref, x_scratch):
    """Embedding gather+sum (ids in SMEM, table resident in VMEM) + MLP."""
    tile_b = x_scratch.shape[0]
    row0 = pl.program_id(0) * tile_b

    def gather_row(r, carry):
        base = (row0 + r) * seq_len
        acc = emb_ref[pl.ds(ids_ref[base], 1), :]          # (1, E_p) f32
        for s in range(1, seq_len):                         # SEQ is small & static
            acc = acc + emb_ref[pl.ds(ids_ref[base + s], 1), :]
        x_scratch[pl.ds(r, 1), :] = acc
        return carry

    lax.fori_loop(0, tile_b, gather_row, 0)

    x = x_scratch[...].astype(jnp.bfloat16)
    out_ref[...] = _mlp(x, w1_ref[...], b1_ref[...], w2_ref[...], b2_ref[...],
                        w3_ref[...], b3_ref[...]).astype(out_ref.dtype)


def mlp_only_kernel(x_ref, w1_ref, b1_ref, w2_ref, b2_ref, w3_ref, b3_ref,
                    out_ref):
    """Fallback: gather done in XLA wrapper; kernel is matmul->bias->relu chain."""
    out_ref[...] = _mlp(x_ref[...], w1_ref[...], b1_ref[...], w2_ref[...],
                        b2_ref[...], w3_ref[...], b3_ref[...]).astype(out_ref.dtype)


def prepare_params(params, *, n_outputs):
    """Fold eval-mode BatchNorm into the Linears, lane-pad to 128 and cast to
    bf16 ONCE at model-load time (hoisted out of the per-call forward)."""
    def fold(w, b, g, be, m, v):
        scale = g * jax.lax.rsqrt(v + BN_EPS)               # (1, H)
        return w * scale, (b - m) * scale + be

    w1, b1 = fold(params["w1"], params["b1"], params["g1"], params["be1"],
                  params["m1"], params["v1"])
    w2, b2 = fold(params["w2"], params["b2"], params["g2"], params["be2"],
                  params["m2"], params["v2"])
    w3, b3 = params["w3"], params["b3"]
    emb = params["emb"]

    h1, h2 = w1.shape[1], w2.shape[1]
    # The torch forward applies fc2 to fc2's own output and fc3 to that, so the
    # module only works when these widths agree; rely on it for padding.
    assert h1 == h2 and w3.shape[0] == h2, "NeuralBOW forward requires h1==h2==h3"

    e_p = _round_up(emb.shape[1], LANE)
    h_p = _round_up(h1, LANE)
    o_p = _round_up(n_outputs, LANE)
    v_p = _round_up(emb.shape[0], 8)

    def pad2(x, r, c):
        return jnp.pad(x, ((0, r - x.shape[0]), (0, c - x.shape[1])))

    # Zero padding is exact: padded columns stay 0 through bias+ReLU and
    # contribute nothing downstream (folded biases are padded with exact 0s).
    return {
        "emb_p": pad2(emb, v_p, e_p).astype(jnp.float32),   # f32: exact seq-sum
        "w1_p": pad2(w1, e_p, h_p).astype(jnp.bfloat16),
        "b1_p": pad2(b1, 1, h_p).astype(jnp.float32),
        "w2_p": pad2(w2, h_p, h_p).astype(jnp.bfloat16),
        "b2_p": pad2(b2, 1, h_p).astype(jnp.float32),
        "w3_p": pad2(w3, h_p, o_p).astype(jnp.bfloat16),
        "b3_p": pad2(b3, 1, o_p).astype(jnp.float32),
    }


@functools.partial(jax.jit, static_argnames=("n_outputs",))
def neural_bow_forward(token_ids, prepared, *, n_outputs):
    """token_ids: (B, SEQ) int32.  prepared: output of prepare_params().
    Returns logits (B, n_outputs) float32."""
    batch, seq_len = token_ids.shape
    emb_p = prepared["emb_p"]
    v_p, e_p = emb_p.shape
    h_p = prepared["w1_p"].shape[1]
    o_p = prepared["w3_p"].shape[1]

    tile_b, b_p = _choose_batch_tiling(batch)
    grid = (b_p // tile_b,)
    resident = lambda *_: (0, 0)              # weights/table stay pinned in VMEM

    flops = 2 * b_p * (e_p * h_p + 2 * h_p * h_p + h_p * o_p)
    weight_bytes = (prepared["w1_p"].size * 2 + prepared["w2_p"].size * 2 +
                    prepared["w3_p"].size * 2 + (2 * h_p + o_p) * 4)
    compiler_params = pltpu.CompilerParams(
        dimension_semantics=("parallel",),
        vmem_limit_bytes=32 * 1024 * 1024,    # fits v5e/v6e/v7x comfortably
    )

    use_fused = (emb_p.size * 4 <= _EMB_VMEM_BUDGET and
                 b_p * seq_len * 4 <= _SMEM_IDS_BUDGET)

    if use_fused:
        # Fused gather+sum: ids padded with 0 (valid row; padded output rows are
        # sliced away), flattened for SMEM scalar prefetch.
        ids_flat = jnp.pad(token_ids.astype(jnp.int32),
                           ((0, b_p - batch), (0, 0))).reshape(-1)
        bytes_accessed = (ids_flat.size * 4 + emb_p.size * 4 + weight_bytes
                          + b_p * o_p * 2)
        out_p = pl.pallas_call(
            functools.partial(fused_bow_kernel, seq_len),
            out_shape=jax.ShapeDtypeStruct((b_p, o_p), jnp.bfloat16),
            grid_spec=pltpu.PrefetchScalarGridSpec(
                num_scalar_prefetch=1,
                grid=grid,
                in_specs=[
                    pl.BlockSpec((v_p, e_p), resident),      # embedding table
                    pl.BlockSpec((e_p, h_p), resident),      # w1'
                    pl.BlockSpec((1, h_p), resident),        # b1'
                    pl.BlockSpec((h_p, h_p), resident),      # w2'
                    pl.BlockSpec((1, h_p), resident),        # b2'
                    pl.BlockSpec((h_p, o_p), resident),      # w3
                    pl.BlockSpec((1, o_p), resident),        # b3
                ],
                out_specs=pl.BlockSpec((tile_b, o_p), lambda i, ids: (i, 0)),
                scratch_shapes=[pltpu.VMEM((tile_b, e_p), jnp.float32)],
            ),
            compiler_params=compiler_params,
            cost_estimate=pl.CostEstimate(flops=flops, transcendentals=0,
                                          bytes_accessed=bytes_accessed),
        )(ids_flat, emb_p, prepared["w1_p"], prepared["b1_p"],
          prepared["w2_p"], prepared["b2_p"], prepared["w3_p"], prepared["b3_p"])
    else:
        # TODO(synk): very large vocab / batch*seq: gather stays in XLA; an
        # in-kernel DMA-gather (emb in pl.ANY) could remove this HBM round trip.
        embeds = jnp.take(emb_p, token_ids, axis=0).sum(axis=1)      # (B, e_p) f32
        x_p = jnp.pad(embeds, ((0, b_p - batch), (0, 0))).astype(jnp.bfloat16)
        bytes_accessed = x_p.size * 2 + weight_bytes + b_p * o_p * 2
        out_p = pl.pallas_call(
            mlp_only_kernel,
            out_shape=jax.ShapeDtypeStruct((b_p, o_p), jnp.bfloat16),
            grid_spec=pltpu.PrefetchScalarGridSpec(
                num_scalar_prefetch=0,
                grid=grid,
                in_specs=[
                    pl.BlockSpec((tile_b, e_p), lambda i: (i, 0)),   # embeds tile
                    pl.BlockSpec((e_p, h_p), resident),
                    pl.BlockSpec((1, h_p), resident),
                    pl.BlockSpec((h_p, h_p), resident),
                    pl.BlockSpec((1, h_p), resident),
                    pl.BlockSpec((h_p, o_p), resident),
                    pl.BlockSpec((1, o_p), resident),
                ],
                out_specs=pl.BlockSpec((tile_b, o_p), lambda i: (i, 0)),
            ),
            compiler_params=compiler_params,
            cost_estimate=pl.CostEstimate(flops=flops, transcendentals=0,
                                          bytes_accessed=bytes_accessed),
        )(x_p, prepared["w1_p"], prepared["b1_p"], prepared["w2_p"],
          prepared["b2_p"], prepared["w3_p"], prepared["b3_p"])

    return out_p[:batch, :n_outputs].astype(jnp.float32)


def make_params(key, *, n_tokens, embd_dim, n_hidden, n_outputs):
    """Deterministic synthetic parameters (shapes from NeuralBOW.__init__)."""
    vocab = n_tokens + 1
    h1, h2, h3 = n_hidden
    keys = jax.random.split(key, 12)

    def rnd(k, shape, scale=0.1):
        return (scale * jax.random.normal(k, shape)).astype(jnp.float32)

    return {
        "emb": rnd(keys[0], (vocab, embd_dim), 1.0),
        # Linear weights stored transposed relative to torch: (in, out).
        "w1": rnd(keys[1], (embd_dim, h1)),
        "b1": rnd(keys[2], (1, h1)),
        "w2": rnd(keys[3], (h1, h2)),
        "b2": rnd(keys[4], (1, h2)),
        # forward uses fc3 = Linear(n_hidden[2], n_outputs)
        "w3": rnd(keys[5], (h3, n_outputs)),
        "b3": rnd(keys[6], (1, n_outputs)),
        # BatchNorm1d params / running stats (eval mode).
        "g1": 1.0 + rnd(keys[7], (1, h1)),
        "be1": rnd(keys[8], (1, h1)),
        "m1": rnd(keys[9], (1, h1)),
        "v1": jnp.abs(1.0 + rnd(keys[10], (1, h1))),
        "g2": 1.0 + rnd(keys[11], (1, h2)),
        "be2": rnd(keys[7], (1, h2)),
        "m2": rnd(keys[8], (1, h2)),
        "v2": jnp.abs(1.0 + rnd(keys[9], (1, h2))),
    }


def reference_forward(token_ids, params):
    """Pure-JAX f32 reference mirroring the PyTorch forward (eval mode)."""
    embeds = params["emb"][token_ids].sum(axis=1)

    def bn_relu(x, g, be, m, v):
        return jnp.maximum((x - m) * jax.lax.rsqrt(v + BN_EPS) * g + be, 0.0)

    h = bn_relu(embeds @ params["w1"] + params["b1"],
                params["g1"], params["be1"], params["m1"], params["v1"])
    h = bn_relu(h @ params["w2"] + params["b2"],
                params["g2"], params["be2"], params["m2"], params["v2"])
    h = bn_relu(h @ params["w2"] + params["b2"],
                params["g2"], params["be2"], params["m2"], params["v2"])
    return h @ params["w3"] + params["b3"]


if __name__ == "__main__":
    # Small, module-consistent configuration.
    BATCH = 4
    MAX_SEQ_LEN = 8
    N_TOKENS = 50          # vocab rows = N_TOKENS + 1
    EMBD_DIM = 32
    N_HIDDEN = [32, 32, 32]
    N_OUTPUTS = 2

    root = jax.random.PRNGKey(0)
    k_params, k_ids = jax.random.split(root)

    params = make_params(
        k_params,
        n_tokens=N_TOKENS,
        embd_dim=EMBD_DIM,
        n_hidden=N_HIDDEN,
        n_outputs=N_OUTPUTS,
    )
    token_ids = jax.random.randint(
        k_ids, (BATCH, MAX_SEQ_LEN), 0, N_TOKENS + 1, dtype=jnp.int32
    )

    # One-time: fold BN, pad, cast (hoisted out of the per-call forward).
    prepared = prepare_params(params, n_outputs=N_OUTPUTS)

    logits = neural_bow_forward(token_ids, prepared, n_outputs=N_OUTPUTS)
    jax.block_until_ready(logits)

    ref = reference_forward(token_ids, params)
    assert logits.shape == (BATCH, N_OUTPUTS)
    # bf16 matmul operands / bf16 logits writeback (f32 accumulate) -> compare
    # with a bf16-appropriate tolerance against the f32 reference.
    assert jnp.allclose(logits, ref, atol=5e-2, rtol=5e-2), "mismatch vs reference"

    print("KERNEL_OK")
</pallas_src>

<mosaic_0001>
module attributes {stable_mosaic.version = 11 : i64} {
  func.func @fused_bow_kernel(%arg0: i32, %arg1: memref<1024xi32, #tpu.memory_space<smem>>, %arg2: memref<56x128xf32, #tpu.memory_space<vmem>>, %arg3: memref<128x128xbf16, #tpu.memory_space<vmem>>, %arg4: memref<1x128xf32, #tpu.memory_space<vmem>>, %arg5: memref<128x128xbf16, #tpu.memory_space<vmem>>, %arg6: memref<1x128xf32, #tpu.memory_space<vmem>>, %arg7: memref<128x128xbf16, #tpu.memory_space<vmem>>, %arg8: memref<1x128xf32, #tpu.memory_space<vmem>>, %arg9: memref<128x128xbf16, #tpu.memory_space<vmem>>, %arg10: memref<128x128xf32, #tpu.memory_space<vmem>>) attributes {dimension_semantics = [#tpu.dimension_semantics<parallel>], iteration_bounds = array<i64: 1>, scalar_prefetch = 1 : i64, scratch_operands = 1 : i64, tpu.core_type = #tpu.core_type<tc>, window_params = [{pipeline_mode = #tpu.pipeline_mode<synchronous>, transform_indices = @transform_0, window_bounds = array<i64: 56, 128>}, {pipeline_mode = #tpu.pipeline_mode<synchronous>, transform_indices = @transform_1, window_bounds = array<i64: 128, 128>}, {pipeline_mode = #tpu.pipeline_mode<synchronous>, transform_indices = @transform_2, window_bounds = array<i64: 1, 128>}, {pipeline_mode = #tpu.pipeline_mode<synchronous>, transform_indices = @transform_3, window_bounds = array<i64: 128, 128>}, {pipeline_mode = #tpu.pipeline_mode<synchronous>, transform_indices = @transform_4, window_bounds = array<i64: 1, 128>}, {pipeline_mode = #tpu.pipeline_mode<synchronous>, transform_indices = @transform_5, window_bounds = array<i64: 128, 128>}, {pipeline_mode = #tpu.pipeline_mode<synchronous>, transform_indices = @transform_6, window_bounds = array<i64: 1, 128>}, {transform_indices = @transform_7, window_bounds = array<i64: 128, 128>}]} {
    %c128_i32 = arith.constant 128 : i32
    %0 = arith.muli %arg0, %c128_i32 : i32
    %c0_i32 = arith.constant 0 : i32
    %c128_i32_0 = arith.constant 128 : i32
    %1 = arith.addi %c0_i32, %c128_i32_0 : i32
    %c1_i32 = arith.constant 1 : i32
    scf.for %arg11 = %c0_i32 to %1 step %c1_i32  : i32 {
      %33 = arith.addi %0, %arg11 : i32
      %c8_i32 = arith.constant 8 : i32
      %34 = arith.muli %33, %c8_i32 : i32
      %35 = arith.index_cast %34 : i32 to index
      %36 = memref.load %arg1[%35] : memref<1024xi32, #tpu.memory_space<smem>>
      %37 = arith.index_cast %36 : i32 to index
      %c0_23 = arith.constant 0 : index
      %38 = vector.load %arg2[%37, %c0_23] : memref<56x128xf32, #tpu.memory_space<vmem>>, vector<1x128xf32>
      %c1_i32_24 = arith.constant 1 : i32
      %39 = arith.addi %34, %c1_i32_24 : i32
      %40 = arith.index_cast %39 : i32 to index
      %41 = memref.load %arg1[%40] : memref<1024xi32, #tpu.memory_space<smem>>
      %42 = arith.index_cast %41 : i32 to index
      %c0_25 = arith.constant 0 : index
      %43 = vector.load %arg2[%42, %c0_25] : memref<56x128xf32, #tpu.memory_space<vmem>>, vector<1x128xf32>
      %44 = arith.addf %38, %43 : vector<1x128xf32>
      %c2_i32 = arith.constant 2 : i32
      %45 = arith.addi %34, %c2_i32 : i32
      %46 = arith.index_cast %45 : i32 to index
      %47 = memref.load %arg1[%46] : memref<1024xi32, #tpu.memory_space<smem>>
      %48 = arith.index_cast %47 : i32 to index
      %c0_26 = arith.constant 0 : index
      %49 = vector.load %arg2[%48, %c0_26] : memref<56x128xf32, #tpu.memory_space<vmem>>, vector<1x128xf32>
      %50 = arith.addf %44, %49 : vector<1x128xf32>
      %c3_i32 = arith.constant 3 : i32
      %51 = arith.addi %34, %c3_i32 : i32
      %52 = arith.index_cast %51 : i32 to index
      %53 = memref.load %arg1[%52] : memref<1024xi32, #tpu.memory_space<smem>>
      %54 = arith.index_cast %53 : i32 to index
      %c0_27 = arith.constant 0 : index
      %55 = vector.load %arg2[%54, %c0_27] : memref<56x128xf32, #tpu.memory_space<vmem>>, vector<1x128xf32>
      %56 = arith.addf %50, %55 : vector<1x128xf32>
      %c4_i32 = arith.constant 4 : i32
      %57 = arith.addi %34, %c4_i32 : i32
      %58 = arith.index_cast %57 : i32 to index
      %59 = memref.load %arg1[%58] : memref<1024xi32, #tpu.memory_space<smem>>
      %60 = arith.index_cast %59 : i32 to index
      %c0_28 = arith.constant 0 : index
      %61 = vector.load %arg2[%60, %c0_28] : memref<56x128xf32, #tpu.memory_space<vmem>>, vector<1x128xf32>
      %62 = arith.addf %56, %61 : vector<1x128xf32>
      %c5_i32 = arith.constant 5 : i32
      %63 = arith.addi %34, %c5_i32 : i32
      %64 = arith.index_cast %63 : i32 to index
      %65 = memref.load %arg1[%64] : memref<1024xi32, #tpu.memory_space<smem>>
      %66 = arith.index_cast %65 : i32 to index
      %c0_29 = arith.constant 0 : index
      %67 = vector.load %arg2[%66, %c0_29] : memref<56x128xf32, #tpu.memory_space<vmem>>, vector<1x128xf32>
      %68 = arith.addf %62, %67 : vector<1x128xf32>
      %c6_i32 = arith.constant 6 : i32
      %69 = arith.addi %34, %c6_i32 : i32
      %70 = arith.index_cast %69 : i32 to index
      %71 = memref.load %arg1[%70] : memref<1024xi32, #tpu.memory_space<smem>>
      %72 = arith.index_cast %71 : i32 to index
      %c0_30 = arith.constant 0 : index
      %73 = vector.load %arg2[%72, %c0_30] : memref<56x128xf32, #tpu.memory_space<vmem>>, vector<1x128xf32>
      %74 = arith.addf %68, %73 : vector<1x128xf32>
      %c7_i32 = arith.constant 7 : i32
      %75 = arith.addi %34, %c7_i32 : i32
      %76 = arith.index_cast %75 : i32 to index
      %77 = memref.load %arg1[%76] : memref<1024xi32, #tpu.memory_space<smem>>
      %78 = arith.index_cast %77 : i32 to index
      %c0_31 = arith.constant 0 : index
      %79 = vector.load %arg2[%78, %c0_31] : memref<56x128xf32, #tpu.memory_space<vmem>>, vector<1x128xf32>
      %80 = arith.addf %74, %79 : vector<1x128xf32>
      %81 = arith.index_cast %arg11 : i32 to index
      %c0_32 = arith.constant 0 : index
      %82 = vector.load %arg10[%81, %c0_32] : memref<128x128xf32, #tpu.memory_space<vmem>>, vector<1x128xf32>
      tpu.vector_store %arg10[%81, %c0_32], %80 {strides = array<i32>} : memref<128x128xf32, #tpu.memory_space<vmem>>, vector<1x128xf32>,
    }
    %c128_i32_1 = arith.constant 128 : i32
    %c0 = arith.constant 0 : index
    %c0_2 = arith.constant 0 : index
    %2 = vector.load %arg10[%c0, %c0_2] : memref<128x128xf32, #tpu.memory_space<vmem>>, vector<128x128xf32>
    %3 = arith.truncf %2 : vector<128x128xf32> to vector<128x128xbf16>
    %c0_3 = arith.constant 0 : index
    %c0_4 = arith.constant 0 : index
    %4 = vector.load %arg3[%c0_3, %c0_4] : memref<128x128xbf16, #tpu.memory_space<vmem>>, vector<128x128xbf16>
    %c0_5 = arith.constant 0 : index
    %c0_6 = arith.constant 0 : index
    %5 = vector.load %arg4[%c0_5, %c0_6] : memref<1x128xf32, #tpu.memory_space<vmem>>, vector<1x128xf32>
    %c0_7 = arith.constant 0 : index
    %c0_8 = arith.constant 0 : index
    %6 = vector.load %arg5[%c0_7, %c0_8] : memref<128x128xbf16, #tpu.memory_space<vmem>>, vector<128x128xbf16>
    %c0_9 = arith.constant 0 : index
    %c0_10 = arith.constant 0 : index
    %7 = vector.load %arg6[%c0_9, %c0_10] : memref<1x128xf32, #tpu.memory_space<vmem>>, vector<1x128xf32>
    %c0_11 = arith.constant 0 : index
    %c0_12 = arith.constant 0 : index
    %8 = vector.load %arg7[%c0_11, %c0_12] : memref<128x128xbf16, #tpu.memory_space<vmem>>, vector<128x128xbf16>
    %c0_13 = arith.constant 0 : index
    %c0_14 = arith.constant 0 : index
    %9 = vector.load %arg8[%c0_13, %c0_14] : memref<1x128xf32, #tpu.memory_space<vmem>>, vector<1x128xf32>
    %cst = arith.constant dense<0.000000e+00> : vector<128x128xf32>
    %10 = tpu.matmul %3, %4, %cst {dimension_numbers = #tpu.dot_dimension_numbers<[1], [0], [0], [1], [0, 0, 1, 1], [], []>} : vector<128x128xbf16>, vector<128x128xbf16>, vector<128x128xf32> -> vector<128x128xf32>
    %11 = vector.broadcast %5 : vector<1x128xf32> to vector<128x128xf32>
    %12 = arith.addf %10, %11 : vector<128x128xf32>
    %cst_15 = arith.constant 0.000000e+00 : f32
    %13 = vector.broadcast %cst_15 : f32 to vector<128x128xf32>
    %14 = arith.maximumf %12, %13 : vector<128x128xf32>
    %15 = arith.truncf %14 : vector<128x128xf32> to vector<128x128xbf16>
    %cst_16 = arith.constant dense<0.000000e+00> : vector<128x128xf32>
    %16 = tpu.matmul %15, %6, %cst_16 {dimension_numbers = #tpu.dot_dimension_numbers<[1], [0], [0], [1], [0, 0, 1, 1], [], []>} : vector<128x128xbf16>, vector<128x128xbf16>, vector<128x128xf32> -> vector<128x128xf32>
    %17 = vector.broadcast %7 : vector<1x128xf32> to vector<128x128xf32>
    %18 = arith.addf %16, %17 : vector<128x128xf32>
    %cst_17 = arith.constant 0.000000e+00 : f32
    %19 = vector.broadcast %cst_17 : f32 to vector<128x128xf32>
    %20 = arith.maximumf %18, %19 : vector<128x128xf32>
    %21 = arith.truncf %20 : vector<128x128xf32> to vector<128x128xbf16>
    %cst_18 = arith.constant dense<0.000000e+00> : vector<128x128xf32>
    %22 = tpu.matmul %21, %6, %cst_18 {dimension_numbers = #tpu.dot_dimension_numbers<[1], [0], [0], [1], [0, 0, 1, 1], [], []>} : vector<128x128xbf16>, vector<128x128xbf16>, vector<128x128xf32> -> vector<128x128xf32>
    %23 = vector.broadcast %7 : vector<1x128xf32> to vector<128x128xf32>
    %24 = arith.addf %22, %23 : vector<128x128xf32>
    %cst_19 = arith.constant 0.000000e+00 : f32
    %25 = vector.broadcast %cst_19 : f32 to vector<128x128xf32>
    %26 = arith.maximumf %24, %25 : vector<128x128xf32>
    %27 = arith.truncf %26 : vector<128x128xf32> to vector<128x128xbf16>
    %cst_20 = arith.constant dense<0.000000e+00> : vector<128x128xf32>
    %28 = tpu.matmul %27, %8, %cst_20 {dimension_numbers = #tpu.dot_dimension_numbers<[1], [0], [0], [1], [0, 0, 1, 1], [], []>} : vector<128x128xbf16>, vector<128x128xbf16>, vector<128x128xf32> -> vector<128x128xf32>
    %29 = vector.broadcast %9 : vector<1x128xf32> to vector<128x128xf32>
    %30 = arith.addf %28, %29 : vector<128x128xf32>
    %31 = arith.truncf %30 : vector<128x128xf32> to vector<128x128xbf16>
    %c0_21 = arith.constant 0 : index
    %c0_22 = arith.constant 0 : index
    %32 = vector.load %arg9[%c0_21, %c0_22] : memref<128x128xbf16, #tpu.memory_space<vmem>>, vector<128x128xbf16>
    tpu.vector_store %arg9[%c0_21, %c0_22], %31 {strides = array<i32>} : memref<128x128xbf16, #tpu.memory_space<vmem>>, vector<128x128xbf16>,
    return
  }
  func.func @transform_0(%arg0: i32, %arg1: memref<1024xi32, #tpu.memory_space<smem>>) -> (i32, i32) {
    %c0_i32 = arith.constant 0 : i32
    %c0_i32_0 = arith.constant 0 : i32
    %c0_i32_1 = arith.constant 0 : i32
    return %c0_i32, %c0_i32_0 : i32, i32
  }
  func.func @transform_1(%arg0: i32, %arg1: memref<1024xi32, #tpu.memory_space<smem>>) -> (i32, i32) {
    %c0_i32 = arith.constant 0 : i32
    %c0_i32_0 = arith.constant 0 : i32
    %c0_i32_1 = arith.constant 0 : i32
    return %c0_i32, %c0_i32_0 : i32, i32
  }
  func.func @transform_2(%arg0: i32, %arg1: memref<1024xi32, #tpu.memory_space<smem>>) -> (i32, i32) {
    %c0_i32 = arith.constant 0 : i32
    %c0_i32_0 = arith.constant 0 : i32
    %c0_i32_1 = arith.constant 0 : i32
    return %c0_i32, %c0_i32_0 : i32, i32
  }
  func.func @transform_3(%arg0: i32, %arg1: memref<1024xi32, #tpu.memory_space<smem>>) -> (i32, i32) {
    %c0_i32 = arith.constant 0 : i32
    %c0_i32_0 = arith.constant 0 : i32
    %c0_i32_1 = arith.constant 0 : i32
    return %c0_i32, %c0_i32_0 : i32, i32
  }
  func.func @transform_4(%arg0: i32, %arg1: memref<1024xi32, #tpu.memory_space<smem>>) -> (i32, i32) {
    %c0_i32 = arith.constant 0 : i32
    %c0_i32_0 = arith.constant 0 : i32
    %c0_i32_1 = arith.constant 0 : i32
    return %c0_i32, %c0_i32_0 : i32, i32
  }
  func.func @transform_5(%arg0: i32, %arg1: memref<1024xi32, #tpu.memory_space<smem>>) -> (i32, i32) {
    %c0_i32 = arith.constant 0 : i32
    %c0_i32_0 = arith.constant 0 : i32
    %c0_i32_1 = arith.constant 0 : i32
    return %c0_i32, %c0_i32_0 : i32, i32
  }
  func.func @transform_6(%arg0: i32, %arg1: memref<1024xi32, #tpu.memory_space<smem>>) -> (i32, i32) {
    %c0_i32 = arith.constant 0 : i32
    %c0_i32_0 = arith.constant 0 : i32
    %c0_i32_1 = arith.constant 0 : i32
    return %c0_i32, %c0_i32_0 : i32, i32
  }
  func.func @transform_7(%arg0: i32, %arg1: memref<1024xi32, #tpu.memory_space<smem>>) -> (i32, i32) {
    %c0_i32 = arith.constant 0 : i32
    %c0_i32_0 = arith.constant 0 : i32
    return %arg0, %c0_i32 : i32, i32
  }
}

</mosaic_0001>

<llo_original>
// kernel: neural_bow_forward.1
$region0: #{neural_bow_forward.1}
  #allocation0 [shape = 'u32[]', space=smem, size = 0x4, offset = 0x4, fixed_abs, tag = 'smem constant byte address 0x4 - core index']
  #allocation1 [shape = 'u32[144,128]{1,0:T(1,128)}', space=vmem, size = 0x12000, scoped, tag = 'internal scratch']
  #allocation2 [shape = 'f32[128,128]{1,0:T(8,128)}', space=vmem, size = 0x10000, scoped, tag = 'scratch operand']
  #allocation3 [shape = 's32[1]{0}', space=sflag, size = 0x4, scoped, tag = 'scoped memory for neural_bow_forward.1']
  #allocation4 [shape = 'u8[4096]{0}', space=smem, size = 0x1000, scoped, tag = 'prefetched SMEM operand 0']
  %s0 = inlined_call_operand.vmem [shape: s32[1024], index: 0, kind: input, shape index: {}]
  %s1 = inlined_call_operand.vmem [shape: f32[56,128], index: 1, kind: input, shape index: {}]
  %s2 = inlined_call_operand.vmem [shape: bf16[128,128], index: 2, kind: input, shape index: {}]
  %s3 = inlined_call_operand.vmem [shape: f32[1,128], index: 3, kind: input, shape index: {}]
  %s4 = inlined_call_operand.vmem [shape: bf16[128,128], index: 4, kind: input, shape index: {}]
  %s5 = inlined_call_operand.vmem [shape: f32[1,128], index: 5, kind: input, shape index: {}]
  %s6 = inlined_call_operand.vmem [shape: bf16[128,128], index: 6, kind: input, shape index: {}]
  %s7 = inlined_call_operand.vmem [shape: f32[1,128], index: 7, kind: input, shape index: {}]
  %s8 = inlined_call_operand.vmem [shape: bf16[128,128], index: 8, kind: output, shape index: {}]
  %s9 = sld [smem:[#allocation0]]
  $region45: #{neural_bow_forward.1} parent=0
    _
  %s11 = ssub.s32 1, %s9
  %s12 = scalar_select 0, %s11, %s9
  %s13 = sshll.u32 %s0, 4
  %s14 = int_to_ptr.vmem [resolvable:$true] %s13
  %16 = dma.vmem_to_smem %s14, 128, [#allocation4], [#allocation3]
  %17 = dma.done [#allocation3], 128
  %18 = sfence
  // Predicated region
  $region2: #{neural_bow_forward.1} parent=0 // pred_check
    _
  $region3: #{neural_bow_forward.1} parent=0 // pred_check_branch
    %20 = sbr.rel (0) target = $region5
  $region4: #{neural_bow_forward.1} parent=0 // pred_region
    _
  $region5: #{neural_bow_forward.1} parent=0 // pred_fallthru
    _
  // Predicated region
  $region6: #{neural_bow_forward.1} parent=0 // pred_check
    _
  $region7: #{neural_bow_forward.1} parent=0 // pred_check_branch
    %22 = sbr.rel (0) target = $region9
  $region8: #{neural_bow_forward.1} parent=0 // pred_region
    _
  $region9: #{neural_bow_forward.1} parent=0 // pred_fallthru
    _
  // Predicated region
  $region10: #{neural_bow_forward.1} parent=0 // pred_check
    _
  $region11: #{neural_bow_forward.1} parent=0 // pred_check_branch
    %24 = sbr.rel (0) target = $region13
  $region12: #{neural_bow_forward.1} parent=0 // pred_region
    _
  $region13: #{neural_bow_forward.1} parent=0 // pred_fallthru
    _
  // Predicated region
  $region14: #{neural_bow_forward.1} parent=0 // pred_check
    _
  $region15: #{neural_bow_forward.1} parent=0 // pred_check_branch
    %26 = sbr.rel (0) target = $region17
  $region16: #{neural_bow_forward.1} parent=0 // pred_region
    _
  $region17: #{neural_bow_forward.1} parent=0 // pred_fallthru
    _
  // Predicated region
  $region18: #{neural_bow_forward.1} parent=0 // pred_check
    _
  $region19: #{neural_bow_forward.1} parent=0 // pred_check_branch
    %28 = sbr.rel (0) target = $region21
  $region20: #{neural_bow_forward.1} parent=0 // pred_region
    _
  $region21: #{neural_bow_forward.1} parent=0 // pred_fallthru
    _
  // Predicated region
  $region22: #{neural_bow_forward.1} parent=0 // pred_check
    _
  $region23: #{neural_bow_forward.1} parent=0 // pred_check_branch
    %30 = sbr.rel (0) target = $region25
  $region24: #{neural_bow_forward.1} parent=0 // pred_region
    _
  $region25: #{neural_bow_forward.1} parent=0 // pred_fallthru
    _
  // Predicated region
  $region26: #{neural_bow_forward.1} parent=0 // pred_check
    _
  $region27: #{neural_bow_forward.1} parent=0 // pred_check_branch
    %32 = sbr.rel (0) target = $region29
  $region28: #{neural_bow_forward.1} parent=0 // pred_region
    _
  $region29: #{neural_bow_forward.1} parent=0 // pred_fallthru
    _
  %s34 = smul.u32 0, 128
  loop: start=0, step=1, limit=128
  $region30: #{neural_bow_forward.1} parent=0 // loop_pre_header
    _
  $region31: #{neural_bow_forward.1} parent=0 // loop_header
    %s36 = sphi 0, %s40
    %p37 = scmp.ge.s32.totalorder %s36, 128
  $region32: #{neural_bow_forward.1} parent=0 // loop_header_branch
    %39 = sbr.rel (%p37) target = $region36
  $region33: #{neural_bow_forward.1} parent=0 // loop_body
    %s41 = sadd.s32 %s34, %s36
    %s42 = smul.u32 %s41, 8
    %s43 = sld [smem:[#allocation4 + %s42]]
    %s44 = scalar_lea.vmem %s1, %s43
    %v45 = vld [vmem:[%s44] sm:$0x1]
    %s46 = sadd.s32 %s42, 1
    %s47 = sld [smem:[#allocation4 + %s46]]
    %s48 = scalar_lea.vmem %s1, %s47
    %v49 = vld [vmem:[%s48] sm:$0x1]
    %v50 = vadd.f32 %v45, %v49
    %s51 = sadd.s32 %s42, 2
    %s52 = sld [smem:[#allocation4 + %s51]]
    %s53 = scalar_lea.vmem %s1, %s52
    %v54 = vld [vmem:[%s53] sm:$0x1]
    %v55 = vadd.f32 %v50, %v54
    %s56 = sadd.s32 %s42, 3
    %s57 = sld [smem:[#allocation4 + %s56]]
    %s58 = scalar_lea.vmem %s1, %s57
    %v59 = vld [vmem:[%s58] sm:$0x1]
    %v60 = vadd.f32 %v55, %v59
    %s61 = sadd.s32 %s42, 4
    %s62 = sld [smem:[#allocation4 + %s61]]
    %s63 = scalar_lea.vmem %s1, %s62
    %v64 = vld [vmem:[%s63] sm:$0x1]
    %v65 = vadd.f32 %v60, %v64
    %s66 = sadd.s32 %s42, 5
    %s67 = sld [smem:[#allocation4 + %s66]]
    %s68 = scalar_lea.vmem %s1, %s67
    %v69 = vld [vmem:[%s68] sm:$0x1]
    %v70 = vadd.f32 %v65, %v69
    %s71 = sadd.s32 %s42, 6
    %s72 = sld [smem:[#allocation4 + %s71]]
    %s73 = scalar_lea.vmem %s1, %s72
    %v74 = vld [vmem:[%s73] sm:$0x1]
    %v75 = vadd.f32 %v70, %v74
    %s76 = sadd.s32 %s42, 7
    %s77 = sld [smem:[#allocation4 + %s76]]
    %s78 = scalar_lea.vmem %s1, %s77
    %v79 = vld [vmem:[%s78] sm:$0x1]
    %v80 = vadd.f32 %v75, %v79
    %s81 = scalar_lea.vmem [#allocation2], %s36
    %82 = vst [vmem:[%s81] sm:$0x1] %v80
  $region34: #{neural_bow_forward.1} parent=0 // loop_footer
    %s40 = sadd.s32 1, %s36
  $region35: #{neural_bow_forward.1} parent=0 // loop_footer_branch
    %35 = sbr.rel target = $region31
  $region36: #{neural_bow_forward.1} parent=0 // loop_exit
    _
  %v83 = vld [vmem:[#allocation2] sm:$0xff]
  %v84 = vld [vmem:[#allocation2 + $0x8] sm:$0xff]
  %v85 = vld [vmem:[#allocation2 + $0x10] sm:$0xff]
  %v86 = vld [vmem:[#allocation2 + $0x18] sm:$0xff]
  %v87 = vld [vmem:[#allocation2 + $0x20] sm:$0xff]
  %v88 = vld [vmem:[#allocation2 + $0x28] sm:$0xff]
  %v89 = vld [vmem:[#allocation2 + $0x30] sm:$0xff]
  %v90 = vld [vmem:[#allocation2 + $0x38] sm:$0xff]
  %v91 = vld [vmem:[#allocation2 + $0x40] sm:$0xff]
  %v92 = vld [vmem:[#allocation2 + $0x48] sm:$0xff]
  %v93 = vld [vmem:[#allocation2 + $0x50] sm:$0xff]
  %v94 = vld [vmem:[#allocation2 + $0x58] sm:$0xff]
  %v95 = vld [vmem:[#allocation2 + $0x60] sm:$0xff]
  %v96 = vld [vmem:[#allocation2 + $0x68] sm:$0xff]
  %v97 = vld [vmem:[#allocation2 + $0x70] sm:$0xff]
  %v98 = vld [vmem:[#allocation2 + $0x78] sm:$0xff]
  %v99 = vpack.c.bf16 %v84, %v83
  %v100 = vpack.c.bf16 %v86, %v85
  %v101 = vpack.c.bf16 %v88, %v87
  %v102 = vpack.c.bf16 %v90, %v89
  %v103 = vpack.c.bf16 %v92, %v91
  %v104 = vpack.c.bf16 %v94, %v93
  %v105 = vpack.c.bf16 %v96, %v95
  %v106 = vpack.c.bf16 %v98, %v97
  %v107 = vld [vmem:[%s2] sm:$0xf]
  %v108 = vld [vmem:[%s2 + $0x4] sm:$0xf]
  %v109 = vld [vmem:[%s2 + $0x8] sm:$0xf]
  %v110 = vld [vmem:[%s2 + $0xc] sm:$0xf]
  %v111 = vld [vmem:[%s2 + $0x10] sm:$0xf]
  %v112 = vld [vmem:[%s2 + $0x14] sm:$0xf]
  %v113 = vld [vmem:[%s2 + $0x18] sm:$0xf]
  %v114 = vld [vmem:[%s2 + $0x1c] sm:$0xf]
  %v115 = vld [vmem:[%s2 + $0x20] sm:$0xf]
  %v116 = vld [vmem:[%s2 + $0x24] sm:$0xf]
  %v117 = vld [vmem:[%s2 + $0x28] sm:$0xf]
  %v118 = vld [vmem:[%s2 + $0x2c] sm:$0xf]
  %v119 = vld [vmem:[%s2 + $0x30] sm:$0xf]
  %v120 = vld [vmem:[%s2 + $0x34] sm:$0xf]
  %v121 = vld [vmem:[%s2 + $0x38] sm:$0xf]
  %v122 = vld [vmem:[%s2 + $0x3c] sm:$0xf]
  %v123 = vld [vmem:[%s3] sm:$0x1]
  %v124 = vld [vmem:[%s4] sm:$0xf]
  %v125 = vld [vmem:[%s4 + $0x4] sm:$0xf]
  %v126 = vld [vmem:[%s4 + $0x8] sm:$0xf]
  %v127 = vld [vmem:[%s4 + $0xc] sm:$0xf]
  %v128 = vld [vmem:[%s4 + $0x10] sm:$0xf]
  %v129 = vld [vmem:[%s4 + $0x14] sm:$0xf]
  %v130 = vld [vmem:[%s4 + $0x18] sm:$0xf]
  %v131 = vld [vmem:[%s4 + $0x1c] sm:$0xf]
  %v132 = vld [vmem:[%s4 + $0x20] sm:$0xf]
  %v133 = vld [vmem:[%s4 + $0x24] sm:$0xf]
  %v134 = vld [vmem:[%s4 + $0x28] sm:$0xf]
  %v135 = vld [vmem:[%s4 + $0x2c] sm:$0xf]
  %v136 = vld [vmem:[%s4 + $0x30] sm:$0xf]
  %v137 = vld [vmem:[%s4 + $0x34] sm:$0xf]
  %v138 = vld [vmem:[%s4 + $0x38] sm:$0xf]
  %v139 = vld [vmem:[%s4 + $0x3c] sm:$0xf]
  %v140 = vld [vmem:[%s5] sm:$0x1]
  %v141 = vld [vmem:[%s6] sm:$0xf]
  %v142 = vld [vmem:[%s6 + $0x4] sm:$0xf]
  %v143 = vld [vmem:[%s6 + $0x8] sm:$0xf]
  %v144 = vld [vmem:[%s6 + $0xc] sm:$0xf]
  %v145 = vld [vmem:[%s6 + $0x10] sm:$0xf]
  %v146 = vld [vmem:[%s6 + $0x14] sm:$0xf]
  %v147 = vld [vmem:[%s6 + $0x18] sm:$0xf]
  %v148 = vld [vmem:[%s6 + $0x1c] sm:$0xf]
  %v149 = vld [vmem:[%s6 + $0x20] sm:$0xf]
  %v150 = vld [vmem:[%s6 + $0x24] sm:$0xf]
  %v151 = vld [vmem:[%s6 + $0x28] sm:$0xf]
  %v152 = vld [vmem:[%s6 + $0x2c] sm:$0xf]
  %v153 = vld [vmem:[%s6 + $0x30] sm:$0xf]
  %v154 = vld [vmem:[%s6 + $0x34] sm:$0xf]
  %v155 = vld [vmem:[%s6 + $0x38] sm:$0xf]
  %v156 = vld [vmem:[%s6 + $0x3c] sm:$0xf]
  %v157 = vld [vmem:[%s7] sm:$0x1]
  %v159 = vlaneseq
  %v160 = vshrl.u32 %v159, 7
  %v161 = vsub.s32 0, %v160
  %v162 = vrot.slane %v123, %v161
  %v180 = vunpack.c.l.b16 %v107
  %v181 = vunpack.c.l.b16 %v108
  %v182 = vunpack.c.l.b16 %v109
  %v183 = vunpack.c.l.b16 %v110
  %v184 = vunpack.c.l.b16 %v111
  %v185 = vunpack.c.l.b16 %v112
  %v186 = vunpack.c.l.b16 %v113
  %v187 = vunpack.c.l.b16 %v114
  %v188 = vunpack.c.l.b16 %v115
  %v189 = vunpack.c.l.b16 %v116
  %v190 = vunpack.c.l.b16 %v117
  %v191 = vunpack.c.l.b16 %v118
  %v192 = vunpack.c.l.b16 %v119
  %v193 = vunpack.c.l.b16 %v120
  %v194 = vunpack.c.l.b16 %v121
  %v195 = vunpack.c.l.b16 %v122
  %v196 = vpack.c.b16 %v181, %v180
  %v197 = vpack.c.b16 %v183, %v182
  %v198 = vpack.c.b16 %v185, %v184
  %v199 = vpack.c.b16 %v187, %v186
  %v200 = vpack.c.b16 %v189, %v188
  %v201 = vpack.c.b16 %v191, %v190
  %v202 = vpack.c.b16 %v193, %v192
  %v203 = vpack.c.b16 %v195, %v194
  %212 = vmatprep.subr.bf16.mxu0 0
  %213 = vmatpush1.bf16.msra.mxu0 %v203
  %214 = vmatprep.subr.bf16.mxu0 0
  %215 = vmatpush1.bf16.msra.mxu0 %v202
  %216 = vmatprep.subr.bf16.mxu0 0
  %217 = vmatpush1.bf16.msra.mxu0 %v201
  %218 = vmatprep.subr.bf16.mxu0 0
  %219 = vmatpush1.bf16.msra.mxu0 %v200
  %220 = vmatprep.subr.bf16.mxu0 0
  %221 = vmatpush1.bf16.msra.mxu0 %v199
  %222 = vmatprep.subr.bf16.mxu0 0
  %223 = vmatpush1.bf16.msra.mxu0 %v198
  %224 = vmatprep.subr.bf16.mxu0 0
  %225 = vmatpush1.bf16.msra.mxu0 %v197
  %226 = vmatprep.subr.bf16.mxu0 0
  %227 = vmatpush1.bf16.msra.mxu0 %v196
  %228 = vmatprep.subr.bf16.mxu0 0
  %229 = vmatpush2.bf16.msra.mxu0 0
  %230 = vmatprep.subr.bf16.mxu0 0
  %231 = vmatpush2.bf16.msra.mxu0 0
  %232 = vmatprep.subr.bf16.mxu0 0
  %233 = vmatpush2.bf16.msra.mxu0 0
  %234 = vmatprep.subr.bf16.mxu0 0
  %235 = vmatpush2.bf16.msra.mxu0 0
  %236 = vmatprep.subr.bf16.mxu0 0
  %237 = vmatpush2.bf16.msra.mxu0 0
  %238 = vmatprep.subr.bf16.mxu0 0
  %239 = vmatpush2.bf16.msra.mxu0 0
  %240 = vmatprep.subr.bf16.mxu0 0
  %241 = vmatpush2.bf16.msra.mxu0 0
  %242 = vmatprep.subr.bf16.mxu0 0
  %243 = vmatpush2.bf16.msra.mxu0 0
  %244 = vmatprep.mubr.bf16.mxu0 0
  %245 = vmatmul.mubr.bf16.gmra.mxu0 %v99
  %v246 = vpop.f32.mrf.mxu0
  %v247 = vadd.f32 %v162, %v246
  %v248 = vpop.f32.mrf.mxu0
  %v249 = vpop.f32.mrf.mxu0
  %v250 = vadd.f32 %v162, %v249
  %v251 = vpop.f32.mrf.mxu0
  %252 = vmatprep.mubr.bf16.mxu0 0
  %253 = vmatmul.mubr.bf16.gmra.mxu0 %v100
  %v254 = vpop.f32.mrf.mxu0
  %v255 = vadd.f32 %v162, %v254
  %v256 = vpop.f32.mrf.mxu0
  %v257 = vpop.f32.mrf.mxu0
  %v258 = vadd.f32 %v162, %v257
  %v259 = vpop.f32.mrf.mxu0
  %260 = vmatprep.mubr.bf16.mxu0 0
  %261 = vmatmul.mubr.bf16.gmra.mxu0 %v101
  %v262 = vpop.f32.mrf.mxu0
  %v263 = vadd.f32 %v162, %v262
  %v264 = vpop.f32.mrf.mxu0
  %v265 = vpop.f32.mrf.mxu0
  %v266 = vadd.f32 %v162, %v265
  %v267 = vpop.f32.mrf.mxu0
  %268 = vmatprep.mubr.bf16.mxu0 0
  %269 = vmatmul.mubr.bf16.gmra.mxu0 %v102
  %v270 = vpop.f32.mrf.mxu0
  %v271 = vadd.f32 %v162, %v270
  %v272 = vpop.f32.mrf.mxu0
  %v273 = vpop.f32.mrf.mxu0
  %v274 = vadd.f32 %v162, %v273
  %v275 = vpop.f32.mrf.mxu0
  %276 = vmatprep.mubr.bf16.mxu0 0
  %277 = vmatmul.mubr.bf16.gmra.mxu0 %v103
  %v278 = vpop.f32.mrf.mxu0
  %v279 = vadd.f32 %v162, %v278
  %v280 = vpop.f32.mrf.mxu0
  %v281 = vpop.f32.mrf.mxu0
  %v282 = vadd.f32 %v162, %v281
  %v283 = vpop.f32.mrf.mxu0
  %284 = vmatprep.mubr.bf16.mxu0 0
  %285 = vmatmul.mubr.bf16.gmra.mxu0 %v104
  %v286 = vpop.f32.mrf.mxu0
  %v287 = vadd.f32 %v162, %v286
  %v288 = vpop.f32.mrf.mxu0
  %v289 = vpop.f32.mrf.mxu0
  %v290 = vadd.f32 %v162, %v289
  %v291 = vpop.f32.mrf.mxu0
  %292 = vmatprep.mubr.bf16.mxu0 0
  %293 = vmatmul.mubr.bf16.gmra.mxu0 %v105
  %v294 = vpop.f32.mrf.mxu0
  %v295 = vadd.f32 %v162, %v294
  %v296 = vpop.f32.mrf.mxu0
  %v297 = vpop.f32.mrf.mxu0
  %v298 = vadd.f32 %v162, %v297
  %v299 = vpop.f32.mrf.mxu0
  %300 = vmatprep.mubr.bf16.mxu0 0
  %301 = vmatmul.mubr.bf16.gmra.mxu0 %v106
  %v302 = vpop.f32.mrf.mxu0
  %v303 = vadd.f32 %v162, %v302
  %v304 = vpop.f32.mrf.mxu0
  %v305 = vpop.f32.mrf.mxu0
  %v306 = vadd.f32 %v162, %v305
  %v307 = vpop.f32.mrf.mxu0
  %308 = vdwg.mxu0
  %v309 = vmax.f32 %v247, 0.0
  %v310 = vmax.f32 %v250, 0.0
  %v311 = vmax.f32 %v255, 0.0
  %v312 = vmax.f32 %v258, 0.0
  %v313 = vmax.f32 %v263, 0.0
  %v314 = vmax.f32 %v266, 0.0
  %v315 = vmax.f32 %v271, 0.0
  %v316 = vmax.f32 %v274, 0.0
  %v317 = vmax.f32 %v279, 0.0
  %v318 = vmax.f32 %v282, 0.0
  %v319 = vmax.f32 %v287, 0.0
  %v320 = vmax.f32 %v290, 0.0
  %v321 = vmax.f32 %v295, 0.0
  %v322 = vmax.f32 %v298, 0.0
  %v323 = vmax.f32 %v303, 0.0
  %v324 = vmax.f32 %v306, 0.0
  %v325 = vpack.c.bf16 %v310, %v309
  %v326 = vpack.c.bf16 %v312, %v311
  %v327 = vpack.c.bf16 %v314, %v313
  %v328 = vpack.c.bf16 %v316, %v315
  %v329 = vpack.c.bf16 %v318, %v317
  %v330 = vpack.c.bf16 %v320, %v319
  %v331 = vpack.c.bf16 %v322, %v321
  %v332 = vpack.c.bf16 %v324, %v323
  %v334 = vlaneseq
  %v335 = vshrl.u32 %v334, 7
  %v336 = vsub.s32 0, %v335
  %v337 = vrot.slane %v140, %v336
  %v355 = vunpack.c.l.b16 %v124
  %v356 = vunpack.c.l.b16 %v125
  %v357 = vunpack.c.l.b16 %v126
  %v358 = vunpack.c.l.b16 %v127
  %v359 = vunpack.c.l.b16 %v128
  %v360 = vunpack.c.l.b16 %v129
  %v361 = vunpack.c.l.b16 %v130
  %v362 = vunpack.c.l.b16 %v131
  %v363 = vunpack.c.l.b16 %v132
  %v364 = vunpack.c.l.b16 %v133
  %v365 = vunpack.c.l.b16 %v134
  %v366 = vunpack.c.l.b16 %v135
  %v367 = vunpack.c.l.b16 %v136
  %v368 = vunpack.c.l.b16 %v137
  %v369 = vunpack.c.l.b16 %v138
  %v370 = vunpack.c.l.b16 %v139
  %v371 = vpack.c.b16 %v356, %v355
  %v372 = vpack.c.b16 %v358, %v357
  %v373 = vpack.c.b16 %v360, %v359
  %v374 = vpack.c.b16 %v362, %v361
  %v375 = vpack.c.b16 %v364, %v363
  %v376 = vpack.c.b16 %v366, %v365
  %v377 = vpack.c.b16 %v368, %v367
  %v378 = vpack.c.b16 %v370, %v369
  %387 = vmatprep.subr.bf16.mxu0 0
  %388 = vmatpush1.bf16.msra.mxu0 %v378
  %389 = vmatprep.subr.bf16.mxu0 0
  %390 = vmatpush1.bf16.msra.mxu0 %v377
  %391 = vmatprep.subr.bf16.mxu0 0
  %392 = vmatpush1.bf16.msra.mxu0 %v376
  %393 = vmatprep.subr.bf16.mxu0 0
  %394 = vmatpush1.bf16.msra.mxu0 %v375
  %395 = vmatprep.subr.bf16.mxu0 0
  %396 = vmatpush1.bf16.msra.mxu0 %v374
  %397 = vmatprep.subr.bf16.mxu0 0
  %398 = vmatpush1.bf16.msra.mxu0 %v373
  %399 = vmatprep.subr.bf16.mxu0 0
  %400 = vmatpush1.bf16.msra.mxu0 %v372
  %401 = vmatprep.subr.bf16.mxu0 0
  %402 = vmatpush1.bf16.msra.mxu0 %v371
  %403 = vmatprep.subr.bf16.mxu0 0
  %404 = vmatpush2.bf16.msra.mxu0 0
  %405 = vmatprep.subr.bf16.mxu0 0
  %406 = vmatpush2.bf16.msra.mxu0 0
  %407 = vmatprep.subr.bf16.mxu0 0
  %408 = vmatpush2.bf16.msra.mxu0 0
  %409 = vmatprep.subr.bf16.mxu0 0
  %410 = vmatpush2.bf16.msra.mxu0 0
  %411 = vmatprep.subr.bf16.mxu0 0
  %412 = vmatpush2.bf16.msra.mxu0 0
  %413 = vmatprep.subr.bf16.mxu0 0
  %414 = vmatpush2.bf16.msra.mxu0 0
  %415 = vmatprep.subr.bf16.mxu0 0
  %416 = vmatpush2.bf16.msra.mxu0 0
  %417 = vmatprep.subr.bf16.mxu0 0
  %418 = vmatpush2.bf16.msra.mxu0 0
  %419 = vmatprep.mubr.bf16.mxu0 0
  %420 = vmatmul.mubr.bf16.gmra.mxu0 %v325
  %v421 = vpop.f32.mrf.mxu0
  %v422 = vadd.f32 %v337, %v421
  %v423 = vpop.f32.mrf.mxu0
  %v424 = vpop.f32.mrf.mxu0
  %v425 = vadd.f32 %v337, %v424
  %v426 = vpop.f32.mrf.mxu0
  %427 = vmatprep.mubr.bf16.mxu0 0
  %428 = vmatmul.mubr.bf16.gmra.mxu0 %v326
  %v429 = vpop.f32.mrf.mxu0
  %v430 = vadd.f32 %v337, %v429
  %v431 = vpop.f32.mrf.mxu0
  %v432 = vpop.f32.mrf.mxu0
  %v433 = vadd.f32 %v337, %v432
  %v434 = vpop.f32.mrf.mxu0
  %435 = vmatprep.mubr.bf16.mxu0 0
  %436 = vmatmul.mubr.bf16.gmra.mxu0 %v327
  %v437 = vpop.f32.mrf.mxu0
  %v438 = vadd.f32 %v337, %v437
  %v439 = vpop.f32.mrf.mxu0
  %v440 = vpop.f32.mrf.mxu0
  %v441 = vadd.f32 %v337, %v440
  %v442 = vpop.f32.mrf.mxu0
  %443 = vmatprep.mubr.bf16.mxu0 0
  %444 = vmatmul.mubr.bf16.gmra.mxu0 %v328
  %v445 = vpop.f32.mrf.mxu0
  %v446 = vadd.f32 %v337, %v445
  %v447 = vpop.f32.mrf.mxu0
  %v448 = vpop.f32.mrf.mxu0
  %v449 = vadd.f32 %v337, %v448
  %v450 = vpop.f32.mrf.mxu0
  %451 = vmatprep.mubr.bf16.mxu0 0
  %452 = vmatmul.mubr.bf16.gmra.mxu0 %v329
  %v453 = vpop.f32.mrf.mxu0
  %v454 = vadd.f32 %v337, %v453
  %v455 = vpop.f32.mrf.mxu0
  %v456 = vpop.f32.mrf.mxu0
  %v457 = vadd.f32 %v337, %v456
  %v458 = vpop.f32.mrf.mxu0
  %459 = vmatprep.mubr.bf16.mxu0 0
  %460 = vmatmul.mubr.bf16.gmra.mxu0 %v330
  %v461 = vpop.f32.mrf.mxu0
  %v462 = vadd.f32 %v337, %v461
  %v463 = vpop.f32.mrf.mxu0
  %v464 = vpop.f32.mrf.mxu0
  %v465 = vadd.f32 %v337, %v464
  %v466 = vpop.f32.mrf.mxu0
  %467 = vmatprep.mubr.bf16.mxu0 0
  %468 = vmatmul.mubr.bf16.gmra.mxu0 %v331
  %v469 = vpop.f32.mrf.mxu0
  %v470 = vadd.f32 %v337, %v469
  %v471 = vpop.f32.mrf.mxu0
  %v472 = vpop.f32.mrf.mxu0
  %v473 = vadd.f32 %v337, %v472
  %v474 = vpop.f32.mrf.mxu0
  %475 = vmatprep.mubr.bf16.mxu0 0
  %476 = vmatmul.mubr.bf16.gmra.mxu0 %v332
  %v477 = vpop.f32.mrf.mxu0
  %v478 = vadd.f32 %v337, %v477
  %v479 = vpop.f32.mrf.mxu0
  %v480 = vpop.f32.mrf.mxu0
  %v481 = vadd.f32 %v337, %v480
  %v482 = vpop.f32.mrf.mxu0
  %483 = vdwg.mxu0
  %v484 = vmax.f32 %v422, 0.0
  %v485 = vmax.f32 %v425, 0.0
  %v486 = vmax.f32 %v430, 0.0
  %v487 = vmax.f32 %v433, 0.0
  %v488 = vmax.f32 %v438, 0.0
  %v489 = vmax.f32 %v441, 0.0
  %v490 = vmax.f32 %v446, 0.0
  %v491 = vmax.f32 %v449, 0.0
  %v492 = vmax.f32 %v454, 0.0
  %v493 = vmax.f32 %v457, 0.0
  %v494 = vmax.f32 %v462, 0.0
  %v495 = vmax.f32 %v465, 0.0
  %v496 = vmax.f32 %v470, 0.0
  %v497 = vmax.f32 %v473, 0.0
  %v498 = vmax.f32 %v478, 0.0
  %v499 = vmax.f32 %v481, 0.0
  %v500 = vpack.c.bf16 %v485, %v484
  %v501 = vpack.c.bf16 %v487, %v486
  %v502 = vpack.c.bf16 %v489, %v488
  %v503 = vpack.c.bf16 %v491, %v490
  %v504 = vpack.c.bf16 %v493, %v492
  %v505 = vpack.c.bf16 %v495, %v494
  %v506 = vpack.c.bf16 %v497, %v496
  %v507 = vpack.c.bf16 %v499, %v498
  %508 = vmatprep.subr.bf16.mxu0 0
  %509 = vmatpush1.bf16.msra.mxu0 %v378
  %510 = vmatprep.subr.bf16.mxu0 0
  %511 = vmatpush1.bf16.msra.mxu0 %v377
  %512 = vmatprep.subr.bf16.mxu0 0
  %513 = vmatpush1.bf16.msra.mxu0 %v376
  %514 = vmatprep.subr.bf16.mxu0 0
  %515 = vmatpush1.bf16.msra.mxu0 %v375
  %516 = vmatprep.subr.bf16.mxu0 0
  %517 = vmatpush1.bf16.msra.mxu0 %v374
  %518 = vmatprep.subr.bf16.mxu0 0
  %519 = vmatpush1.bf16.msra.mxu0 %v373
  %520 = vmatprep.subr.bf16.mxu0 0
  %521 = vmatpush1.bf16.msra.mxu0 %v372
  %522 = vmatprep.subr.bf16.mxu0 0
  %523 = vmatpush1.bf16.msra.mxu0 %v371
  %524 = vmatprep.subr.bf16.mxu0 0
  %525 = vmatpush2.bf16.msra.mxu0 0
  %526 = vmatprep.subr.bf16.mxu0 0
  %527 = vmatpush2.bf16.msra.mxu0 0
  %528 = vmatprep.subr.bf16.mxu0 0
  %529 = vmatpush2.bf16.msra.mxu0 0
  %530 = vmatprep.subr.bf16.mxu0 0
  %531 = vmatpush2.bf16.msra.mxu0 0
  %532 = vmatprep.subr.bf16.mxu0 0
  %533 = vmatpush2.bf16.msra.mxu0 0
  %534 = vmatprep.subr.bf16.mxu0 0
  %535 = vmatpush2.bf16.msra.mxu0 0
  %536 = vmatprep.subr.bf16.mxu0 0
  %537 = vmatpush2.bf16.msra.mxu0 0
  %538 = vmatprep.subr.bf16.mxu0 0
  %539 = vmatpush2.bf16.msra.mxu0 0
  %540 = vmatprep.mubr.bf16.mxu0 0
  %541 = vmatmul.mubr.bf16.gmra.mxu0 %v500
  %v542 = vpop.f32.mrf.mxu0
  %v543 = vadd.f32 %v337, %v542
  %v544 = vpop.f32.mrf.mxu0
  %v545 = vpop.f32.mrf.mxu0
  %v546 = vadd.f32 %v337, %v545
  %v547 = vpop.f32.mrf.mxu0
  %548 = vmatprep.mubr.bf16.mxu0 0
  %549 = vmatmul.mubr.bf16.gmra.mxu0 %v501
  %v550 = vpop.f32.mrf.mxu0
  %v551 = vadd.f32 %v337, %v550
  %v552 = vpop.f32.mrf.mxu0
  %v553 = vpop.f32.mrf.mxu0
  %v554 = vadd.f32 %v337, %v553
  %v555 = vpop.f32.mrf.mxu0
  %556 = vmatprep.mubr.bf16.mxu0 0
  %557 = vmatmul.mubr.bf16.gmra.mxu0 %v502
  %v558 = vpop.f32.mrf.mxu0
  %v559 = vadd.f32 %v337, %v558
  %v560 = vpop.f32.mrf.mxu0
  %v561 = vpop.f32.mrf.mxu0
  %v562 = vadd.f32 %v337, %v561
  %v563 = vpop.f32.mrf.mxu0
  %564 = vmatprep.mubr.bf16.mxu0 0
  %565 = vmatmul.mubr.bf16.gmra.mxu0 %v503
  %v566 = vpop.f32.mrf.mxu0
  %v567 = vadd.f32 %v337, %v566
  %v568 = vpop.f32.mrf.mxu0
  %v569 = vpop.f32.mrf.mxu0
  %v570 = vadd.f32 %v337, %v569
  %v571 = vpop.f32.mrf.mxu0
  %572 = vmatprep.mubr.bf16.mxu0 0
  %573 = vmatmul.mubr.bf16.gmra.mxu0 %v504
  %v574 = vpop.f32.mrf.mxu0
  %v575 = vadd.f32 %v337, %v574
  %v576 = vpop.f32.mrf.mxu0
  %v577 = vpop.f32.mrf.mxu0
  %v578 = vadd.f32 %v337, %v577
  %v579 = vpop.f32.mrf.mxu0
  %580 = vmatprep.mubr.bf16.mxu0 0
  %581 = vmatmul.mubr.bf16.gmra.mxu0 %v505
  %v582 = vpop.f32.mrf.mxu0
  %v583 = vadd.f32 %v337, %v582
  %v584 = vpop.f32.mrf.mxu0
  %v585 = vpop.f32.mrf.mxu0
  %v586 = vadd.f32 %v337, %v585
  %v587 = vpop.f32.mrf.mxu0
  %588 = vmatprep.mubr.bf16.mxu0 0
  %589 = vmatmul.mubr.bf16.gmra.mxu0 %v506
  %v590 = vpop.f32.mrf.mxu0
  %v591 = vadd.f32 %v337, %v590
  %v592 = vpop.f32.mrf.mxu0
  %v593 = vpop.f32.mrf.mxu0
  %v594 = vadd.f32 %v337, %v593
  %v595 = vpop.f32.mrf.mxu0
  %596 = vmatprep.mubr.bf16.mxu0 0
  %597 = vmatmul.mubr.bf16.gmra.mxu0 %v507
  %v598 = vpop.f32.mrf.mxu0
  %v599 = vadd.f32 %v337, %v598
  %v600 = vpop.f32.mrf.mxu0
  %v601 = vpop.f32.mrf.mxu0
  %v602 = vadd.f32 %v337, %v601
  %v603 = vpop.f32.mrf.mxu0
  %604 = vdwg.mxu0
  %v605 = vmax.f32 %v543, 0.0
  %v606 = vmax.f32 %v546, 0.0
  %v607 = vmax.f32 %v551, 0.0
  %v608 = vmax.f32 %v554, 0.0
  %v609 = vmax.f32 %v559, 0.0
  %v610 = vmax.f32 %v562, 0.0
  %v611 = vmax.f32 %v567, 0.0
  %v612 = vmax.f32 %v570, 0.0
  %v613 = vmax.f32 %v575, 0.0
  %v614 = vmax.f32 %v578, 0.0
  %v615 = vmax.f32 %v583, 0.0
  %v616 = vmax.f32 %v586, 0.0
  %v617 = vmax.f32 %v591, 0.0
  %v618 = vmax.f32 %v594, 0.0
  %v619 = vmax.f32 %v599, 0.0
  %v620 = vmax.f32 %v602, 0.0
  %v621 = vpack.c.bf16 %v606, %v605
  %v622 = vpack.c.bf16 %v608, %v607
  %v623 = vpack.c.bf16 %v610, %v609
  %v624 = vpack.c.bf16 %v612, %v611
  %v625 = vpack.c.bf16 %v614, %v613
  %v626 = vpack.c.bf16 %v616, %v615
  %v627 = vpack.c.bf16 %v618, %v617
  %v628 = vpack.c.bf16 %v620, %v619
  %v630 = vlaneseq
  %v631 = vshrl.u32 %v630, 7
  %v632 = vsub.s32 0, %v631
  %v633 = vrot.slane %v157, %v632
  %v651 = vunpack.c.l.b16 %v141
  %v652 = vunpack.c.l.b16 %v142
  %v653 = vunpack.c.l.b16 %v143
  %v654 = vunpack.c.l.b16 %v144
  %v655 = vunpack.c.l.b16 %v145
  %v656 = vunpack.c.l.b16 %v146
  %v657 = vunpack.c.l.b16 %v147
  %v658 = vunpack.c.l.b16 %v148
  %v659 = vunpack.c.l.b16 %v149
  %v660 = vunpack.c.l.b16 %v150
  %v661 = vunpack.c.l.b16 %v151
  %v662 = vunpack.c.l.b16 %v152
  %v663 = vunpack.c.l.b16 %v153
  %v664 = vunpack.c.l.b16 %v154
  %v665 = vunpack.c.l.b16 %v155
  %v666 = vunpack.c.l.b16 %v156
  %v667 = vpack.c.b16 %v652, %v651
  %v668 = vpack.c.b16 %v654, %v653
  %v669 = vpack.c.b16 %v656, %v655
  %v670 = vpack.c.b16 %v658, %v657
  %v671 = vpack.c.b16 %v660, %v659
  %v672 = vpack.c.b16 %v662, %v661
  %v673 = vpack.c.b16 %v664, %v663
  %v674 = vpack.c.b16 %v666, %v665
  %683 = vmatprep.subr.bf16.mxu0 0
  %684 = vmatpush1.bf16.msra.mxu0 %v674
  %685 = vmatprep.subr.bf16.mxu0 0
  %686 = vmatpush1.bf16.msra.mxu0 %v673
  %687 = vmatprep.subr.bf16.mxu0 0
  %688 = vmatpush1.bf16.msra.mxu0 %v672
  %689 = vmatprep.subr.bf16.mxu0 0
  %690 = vmatpush1.bf16.msra.mxu0 %v671
  %691 = vmatprep.subr.bf16.mxu0 0
  %692 = vmatpush1.bf16.msra.mxu0 %v670
  %693 = vmatprep.subr.bf16.mxu0 0
  %694 = vmatpush1.bf16.msra.mxu0 %v669
  %695 = vmatprep.subr.bf16.mxu0 0
  %696 = vmatpush1.bf16.msra.mxu0 %v668
  %697 = vmatprep.subr.bf16.mxu0 0
  %698 = vmatpush1.bf16.msra.mxu0 %v667
  %699 = vmatprep.subr.bf16.mxu0 0
  %700 = vmatpush2.bf16.msra.mxu0 0
  %701 = vmatprep.subr.bf16.mxu0 0
  %702 = vmatpush2.bf16.msra.mxu0 0
  %703 = vmatprep.subr.bf16.mxu0 0
  %704 = vmatpush2.bf16.msra.mxu0 0
  %705 = vmatprep.subr.bf16.mxu0 0
  %706 = vmatpush2.bf16.msra.mxu0 0
  %707 = vmatprep.subr.bf16.mxu0 0
  %708 = vmatpush2.bf16.msra.mxu0 0
  %709 = vmatprep.subr.bf16.mxu0 0
  %710 = vmatpush2.bf16.msra.mxu0 0
  %711 = vmatprep.subr.bf16.mxu0 0
  %712 = vmatpush2.bf16.msra.mxu0 0
  %713 = vmatprep.subr.bf16.mxu0 0
  %714 = vmatpush2.bf16.msra.mxu0 0
  %715 = vmatprep.mubr.bf16.mxu0 0
  %716 = vmatmul.mubr.bf16.gmra.mxu0 %v621
  %v717 = vpop.f32.mrf.mxu0
  %v718 = vadd.f32 %v633, %v717
  %v719 = vpop.f32.mrf.mxu0
  %v720 = vpop.f32.mrf.mxu0
  %v721 = vadd.f32 %v633, %v720
  %v722 = vpop.f32.mrf.mxu0
  %723 = vmatprep.mubr.bf16.mxu0 0
  %724 = vmatmul.mubr.bf16.gmra.mxu0 %v622
  %v725 = vpop.f32.mrf.mxu0
  %v726 = vadd.f32 %v633, %v725
  %v727 = vpop.f32.mrf.mxu0
  %v728 = vpop.f32.mrf.mxu0
  %v729 = vadd.f32 %v633, %v728
  %v730 = vpop.f32.mrf.mxu0
  %731 = vmatprep.mubr.bf16.mxu0 0
  %732 = vmatmul.mubr.bf16.gmra.mxu0 %v623
  %v733 = vpop.f32.mrf.mxu0
  %v734 = vadd.f32 %v633, %v733
  %v735 = vpop.f32.mrf.mxu0
  %v736 = vpop.f32.mrf.mxu0
  %v737 = vadd.f32 %v633, %v736
  %v738 = vpop.f32.mrf.mxu0
  %739 = vmatprep.mubr.bf16.mxu0 0
  %740 = vmatmul.mubr.bf16.gmra.mxu0 %v624
  %v741 = vpop.f32.mrf.mxu0
  %v742 = vadd.f32 %v633, %v741
  %v743 = vpop.f32.mrf.mxu0
  %v744 = vpop.f32.mrf.mxu0
  %v745 = vadd.f32 %v633, %v744
  %v746 = vpop.f32.mrf.mxu0
  %747 = vmatprep.mubr.bf16.mxu0 0
  %748 = vmatmul.mubr.bf16.gmra.mxu0 %v625
  %v749 = vpop.f32.mrf.mxu0
  %v750 = vadd.f32 %v633, %v749
  %v751 = vpop.f32.mrf.mxu0
  %v752 = vpop.f32.mrf.mxu0
  %v753 = vadd.f32 %v633, %v752
  %v754 = vpop.f32.mrf.mxu0
  %755 = vmatprep.mubr.bf16.mxu0 0
  %756 = vmatmul.mubr.bf16.gmra.mxu0 %v626
  %v757 = vpop.f32.mrf.mxu0
  %v758 = vadd.f32 %v633, %v757
  %v759 = vpop.f32.mrf.mxu0
  %v760 = vpop.f32.mrf.mxu0
  %v761 = vadd.f32 %v633, %v760
  %v762 = vpop.f32.mrf.mxu0
  %763 = vmatprep.mubr.bf16.mxu0 0
  %764 = vmatmul.mubr.bf16.gmra.mxu0 %v627
  %v765 = vpop.f32.mrf.mxu0
  %v766 = vadd.f32 %v633, %v765
  %v767 = vpop.f32.mrf.mxu0
  %v768 = vpop.f32.mrf.mxu0
  %v769 = vadd.f32 %v633, %v768
  %v770 = vpop.f32.mrf.mxu0
  %771 = vmatprep.mubr.bf16.mxu0 0
  %772 = vmatmul.mubr.bf16.gmra.mxu0 %v628
  %v773 = vpop.f32.mrf.mxu0
  %v774 = vadd.f32 %v633, %v773
  %v775 = vpop.f32.mrf.mxu0
  %v776 = vpop.f32.mrf.mxu0
  %v777 = vadd.f32 %v633, %v776
  %v778 = vpop.f32.mrf.mxu0
  %779 = vdwg.mxu0
  %v780 = vpack.c.bf16 %v721, %v718
  %v781 = vpack.c.bf16 %v729, %v726
  %v782 = vpack.c.bf16 %v737, %v734
  %v783 = vpack.c.bf16 %v745, %v742
  %v784 = vpack.c.bf16 %v753, %v750
  %v785 = vpack.c.bf16 %v761, %v758
  %v786 = vpack.c.bf16 %v769, %v766
  %v787 = vpack.c.bf16 %v777, %v774
  %v796 = vunpack.c.l.b16 %v780
  %v797 = vunpack.c.h.b16 %v780
  %v798 = vunpack.c.l.b16 %v781
  %v799 = vunpack.c.h.b16 %v781
  %v800 = vunpack.c.l.b16 %v782
  %v801 = vunpack.c.h.b16 %v782
  %v802 = vunpack.c.l.b16 %v783
  %v803 = vunpack.c.h.b16 %v783
  %v804 = vunpack.c.l.b16 %v784
  %v805 = vunpack.c.h.b16 %v784
  %v806 = vunpack.c.l.b16 %v785
  %v807 = vunpack.c.h.b16 %v785
  %v808 = vunpack.c.l.b16 %v786
  %v809 = vunpack.c.h.b16 %v786
  %v810 = vunpack.c.l.b16 %v787
  %v811 = vunpack.c.h.b16 %v787
  %v812 = vpack.c.b16 %v796, %v796
  %v813 = vpack.c.b16 %v797, %v797
  %v814 = vpack.c.b16 %v798, %v798
  %v815 = vpack.c.b16 %v799, %v799
  %v816 = vpack.c.b16 %v800, %v800
  %v817 = vpack.c.b16 %v801, %v801
  %v818 = vpack.c.b16 %v802, %v802
  %v819 = vpack.c.b16 %v803, %v803
  %v820 = vpack.c.b16 %v804, %v804
  %v821 = vpack.c.b16 %v805, %v805
  %v822 = vpack.c.b16 %v806, %v806
  %v823 = vpack.c.b16 %v807, %v807
  %v824 = vpack.c.b16 %v808, %v808
  %v825 = vpack.c.b16 %v809, %v809
  %v826 = vpack.c.b16 %v810, %v810
  %v827 = vpack.c.b16 %v811, %v811
  %844 = vst [vmem:[%s8] sm:$0xf] %v812
  %845 = vst [vmem:[%s8 + $0x4] sm:$0xf] %v813
  %846 = vst [vmem:[%s8 + $0x8] sm:$0xf] %v814
  %847 = vst [vmem:[%s8 + $0xc] sm:$0xf] %v815
  %848 = vst [vmem:[%s8 + $0x10] sm:$0xf] %v816
  %849 = vst [vmem:[%s8 + $0x14] sm:$0xf] %v817
  %850 = vst [vmem:[%s8 + $0x18] sm:$0xf] %v818
  %851 = vst [vmem:[%s8 + $0x1c] sm:$0xf] %v819
  %852 = vst [vmem:[%s8 + $0x20] sm:$0xf] %v820
  %853 = vst [vmem:[%s8 + $0x24] sm:$0xf] %v821
  %854 = vst [vmem:[%s8 + $0x28] sm:$0xf] %v822
  %855 = vst [vmem:[%s8 + $0x2c] sm:$0xf] %v823
  %856 = vst [vmem:[%s8 + $0x30] sm:$0xf] %v824
  %857 = vst [vmem:[%s8 + $0x34] sm:$0xf] %v825
  %858 = vst [vmem:[%s8 + $0x38] sm:$0xf] %v826
  %859 = vst [vmem:[%s8 + $0x3c] sm:$0xf] %v827
  // Predicated region
  $region37: #{neural_bow_forward.1} parent=0 // pred_check
    _
  $region38: #{neural_bow_forward.1} parent=0 // pred_check_branch
    %861 = sbr.rel (0) target = $region40
  $region39: #{neural_bow_forward.1} parent=0 // pred_region
    _
  $region40: #{neural_bow_forward.1} parent=0 // pred_fallthru
    _
  // Predicated region
  $region41: #{neural_bow_forward.1} parent=0 // pred_check
    _
  $region42: #{neural_bow_forward.1} parent=0 // pred_check_branch
    %863 = sbr.rel (0) target = $region44
  $region43: #{neural_bow_forward.1} parent=0 // pred_region
    _
  $region44: #{neural_bow_forward.1} parent=0 // pred_fallthru
    _

</llo_original>
